<compile_context>
chip_gen: v6e
topology: v6e:2x2x1
jax: 0.10.0
libtpu: 0.0.40
codegen_flags: <defaults>
</compile_context>

<pallas_src>
import functools

import jax
import jax.numpy as jnp
from jax.experimental import pallas as pl
from jax.experimental.pallas import tpu as pltpu

IN_FEATURES = 30


def _round_up(x, m):
    return ((x + m - 1) // m) * m


def _vmem_capacity_bytes():
    try:
        return int(pltpu.get_tpu_info().vmem_capacity_bytes)
    except Exception:
        return 64 * 1024 * 1024  # conservative (v7x per-TC VMEM)


def _default_tile_rows():
    """Generation-sized batch tile so per-tile DMA time >> ~0.35us step overhead."""
    try:
        kind = jax.devices()[0].device_kind.lower()
    except Exception:
        kind = ""
    if "v7" in kind or "tpu7" in kind:
        return 32768          # 3.2 TB/s HBM needs the largest tiles
    if "v6" in kind:
        return 16384
    return 8192               # v5e and unknown chips


@functools.lru_cache(maxsize=None)
def _single_buffer_ok():
    """Probe: invariant inputs single-buffered via pipeline_mode=pl.Buffered(1)?

    Checks both that it lowers/runs and that results are numerically correct
    across a multi-step grid; any failure disables the optimization.
    """
    try:
        def _k(w_ref, x_ref, o_ref):
            o_ref[...] = w_ref[...] + x_ref[...]

        w = jnp.arange(8 * 128, dtype=jnp.float32).reshape(8, 128)
        x = jnp.arange(4 * 8 * 128, dtype=jnp.float32).reshape(32, 128)
        out = pl.pallas_call(
            _k,
            out_shape=jax.ShapeDtypeStruct((32, 128), jnp.float32),
            grid=(4,),
            in_specs=[
                pl.BlockSpec((8, 128), lambda i: (0, 0),
                             pipeline_mode=pl.Buffered(1)),
                pl.BlockSpec((8, 128), lambda i: (i, 0)),
            ],
            out_specs=pl.BlockSpec((8, 128), lambda i: (i, 0)),
        )(w, x)
        expected = x + jnp.tile(w, (4, 1))
        return bool(jnp.allclose(out, expected))
    except Exception:
        return False


def _vmem_budget_bytes(tile_b, *, neurons, x_itemsize, compute_itemsize,
                       features_major, single_buffer_weights):
    """Rough per-call VMEM footprint used for tile clamping / vmem_limit_bytes."""
    n8 = _round_up(neurons, 8)
    n128 = _round_up(neurons, 128)
    # Streamed x block (double-buffered by the pipeline).
    if features_major:
        x_buf = _round_up(IN_FEATURES, 8) * tile_b * x_itemsize   # (30,tile_b): 30->32 sublanes
    else:
        x_buf = tile_b * 128 * x_itemsize                         # (tile_b,30): 30->128 lanes
    out_buf = 8 * tile_b * 4                                      # (1,tile_b) -> 8 sublanes
    # (N, tile_b) f32 activations / temps (+ a compute_dtype copy if narrowed).
    acts = 3 * n8 * tile_b * 4
    if compute_itemsize < 4:
        acts += n8 * tile_b * compute_itemsize
    w_bytes = (n8 * 128 * compute_itemsize          # w0 (N, 30), lanes padded to 128
               + n8 * n128 * compute_itemsize       # w1 (N, N)
               + 2 * n8 * 128 * 4                   # b0, b1 (N, 1)
               + n8 * 128 * 4 + 8 * 128 * 4)        # w2 (N, 1), b2 (1, 1)
    wb = 1 if single_buffer_weights else 2
    return 2 * (x_buf + out_buf) + acts + wb * w_bytes


def mlp_kernel(x_ref, w0_ref, b0_ref, w1_ref, b1_ref, w2_ref, b2_ref, o_ref,
               *, compute_dtype, features_major):
    # Layouts (batch on the 128-wide lane axis, weight-stationary):
    #   x_ref:  (tile_b, 30) batch-major OR (30, tile_b) feature-major
    #   w0_ref: (N, 30)  compute_dtype (pre-cast in wrapper; PyTorch (out, in) layout)
    #   b0_ref: (N, 1)   f32
    #   w1_ref: (N, N)   compute_dtype
    #   b1_ref: (N, 1)   f32
    #   w2_ref: (N, 1)   f32 (dense2 weight stored as a column)
    #   b2_ref: (1, 1)   f32
    #   o_ref:  (1, tile_b) lane-dense output block (batch on lanes)
    x = x_ref[...].astype(compute_dtype)

    if features_major:
        # dense0: (N, 30) @ (30, tile_b) -> (N, tile_b); x block is lane-dense.
        h = jnp.dot(w0_ref[...], x, preferred_element_type=jnp.float32)
    else:
        # dense0: contract (N, 30) with (tile_b, 30) over features -> (N, tile_b).
        h = jax.lax.dot_general(
            w0_ref[...], x,
            dimension_numbers=(((1,), (1,)), ((), ())),
            preferred_element_type=jnp.float32)
    h = jnp.maximum(h + b0_ref[...], 0.0)                       # ReLU, f32

    # dense1: (N, N) @ (N, tile_b) -> (N, tile_b), f32 accumulation.
    h = jnp.dot(w1_ref[...], h.astype(compute_dtype),
                preferred_element_type=jnp.float32)
    h = jnp.maximum(h + b1_ref[...], 0.0)

    # dense2 (N -> 1): VPU multiply + sublane reduction (skips a 1-column matmul).
    logit = jnp.sum(h * w2_ref[...], axis=0, keepdims=True) + b2_ref[...]

    # Sigmoid in f32; the (1, tile_b) store is fully lane-dense (unmasked vst).
    o_ref[...] = jax.nn.sigmoid(logit)


def classificador_forward(x, params, *, tile_b=None, compute_dtype=jnp.float32,
                          features_major=False):
    """Forward pass of the 30 -> N -> N -> 1 sigmoid MLP as one Pallas kernel.

    params follow the PyTorch nn.Linear convention:
      w0 (N, 30), b0 (N,), w1 (N, N), b1 (N,), w2 (1, N), b2 (1,)

    x is (B, 30) by default.  With features_major=True the producer must supply
    x as (30, B); this makes the streamed block lane-dense (no 30->128 lane
    padding).  Do NOT transpose in the wrapper -- that re-reads x from HBM and
    erases the win.  x may be stored in bf16 to halve its HBM traffic; set
    compute_dtype=jnp.bfloat16 to also run the matmuls in bf16 (f32 accumulate).
    """
    w0, b0, w1, b1, w2, b2 = params
    neurons = w0.shape[0]
    compute_dtype = jnp.dtype(compute_dtype)

    if features_major:
        assert x.shape[0] == IN_FEATURES
        B = x.shape[1]
    else:
        assert x.shape[1] == IN_FEATURES
        B = x.shape[0]

    single_buffer = _single_buffer_ok()
    vmem_cap = _vmem_capacity_bytes()
    budget = functools.partial(
        _vmem_budget_bytes, neurons=neurons, x_itemsize=x.dtype.itemsize,
        compute_itemsize=compute_dtype.itemsize, features_major=features_major,
        single_buffer_weights=single_buffer)

    # --- batch tile selection -------------------------------------------------
    if tile_b is None:
        t = _default_tile_rows()
        t = min(t, _round_up(B, 128))
        if B >= 256:                      # keep >=2 grid steps for megacore (v7x)
            t = min(t, _round_up((B + 1) // 2, 128))
    else:
        t = min(int(tile_b), _round_up(B, 128))
    t = max(128, _round_up(t, 128))
    while t > 256 and budget(t) > 0.7 * vmem_cap:
        t = max(256, _round_up(t // 2, 128))
    tile_b = t

    num_tiles = pl.cdiv(B, tile_b)
    b_padded = num_tiles * tile_b

    if features_major:
        if b_padded != B:
            x = jnp.pad(x, ((0, 0), (0, b_padded - B)))
        x_spec = pl.BlockSpec((IN_FEATURES, tile_b), lambda i: (0, i))
    else:
        if b_padded != B:
            x = jnp.pad(x, ((0, b_padded - B), (0, 0)))
        x_spec = pl.BlockSpec((tile_b, IN_FEATURES), lambda i: (i, 0))

    # Pre-cast matmul weights once in the wrapper (not per grid step on the VPU).
    w0c = w0.astype(compute_dtype)
    w1c = w1.astype(compute_dtype)
    # Column layouts so biases / last-layer weight broadcast over the lane (batch) axis.
    b0c = b0.reshape(neurons, 1).astype(jnp.float32)
    b1c = b1.reshape(neurons, 1).astype(jnp.float32)
    w2c = w2.reshape(neurons, 1).astype(jnp.float32)   # (1, N) -> (N, 1)
    b2c = b2.reshape(1, 1).astype(jnp.float32)

    def inv_spec(shape):
        # Invariant weights/biases: constant index map; single-buffer if supported.
        if single_buffer:
            return pl.BlockSpec(shape, lambda i: (0, 0),
                                pipeline_mode=pl.Buffered(1))
        return pl.BlockSpec(shape, lambda i: (0, 0))

    kernel = functools.partial(mlp_kernel, compute_dtype=compute_dtype,
                               features_major=features_major)

    flops = 2 * b_padded * (IN_FEATURES * neurons + neurons * neurons + neurons)
    bytes_accessed = (
        b_padded * IN_FEATURES * x.dtype.itemsize
        + compute_dtype.itemsize * (w0.size + w1.size)
        + 4 * (w2.size + b0.size + b1.size + b2.size)
        + 4 * b_padded)
    cost = pl.CostEstimate(flops=flops, transcendentals=b_padded,
                           bytes_accessed=bytes_accessed)

    vmem_limit = int(min(0.9 * vmem_cap,
                         max(budget(tile_b) * 1.3 + (4 << 20), 32 << 20)))

    out2d = pl.pallas_call(
        kernel,
        out_shape=jax.ShapeDtypeStruct((1, b_padded), jnp.float32),
        grid_spec=pltpu.PrefetchScalarGridSpec(
            num_scalar_prefetch=0,
            grid=(num_tiles,),
            in_specs=[
                x_spec,                               # x (streamed, double-buffered)
                inv_spec((neurons, IN_FEATURES)),     # w0
                inv_spec((neurons, 1)),               # b0
                inv_spec((neurons, neurons)),         # w1
                inv_spec((neurons, 1)),               # b1
                inv_spec((neurons, 1)),               # w2
                inv_spec((1, 1)),                     # b2
            ],
            out_specs=pl.BlockSpec((1, tile_b), lambda i: (0, i)),
        ),
        compiler_params=pltpu.CompilerParams(
            dimension_semantics=("parallel",),
            vmem_limit_bytes=vmem_limit,
        ),
        cost_estimate=cost,
    )(x, w0c, b0c, w1c, b1c, w2c, b2c)

    return out2d[0, :B].reshape(B, 1)


def init_params(key, neurons):
    """Deterministic init mimicking nn.Linear shapes (PyTorch (out, in) convention)."""
    k0, k1, k2, kb0, kb1, kb2 = jax.random.split(key, 6)

    def uni(k, shape, fan_in):
        bound = 1.0 / jnp.sqrt(jnp.float32(fan_in))
        return jax.random.uniform(k, shape, jnp.float32, -bound, bound)

    w0 = uni(k0, (neurons, IN_FEATURES), IN_FEATURES)
    b0 = uni(kb0, (neurons,), IN_FEATURES)
    w1 = uni(k1, (neurons, neurons), neurons)
    b1 = uni(kb1, (neurons,), neurons)
    w2 = uni(k2, (1, neurons), neurons)
    b2 = uni(kb2, (1,), neurons)
    return (w0, b0, w1, b1, w2, b2)


def reference_forward(x, params):
    w0, b0, w1, b1, w2, b2 = params
    h = jnp.maximum(x @ w0.T + b0, 0.0)
    h = jnp.maximum(h @ w1.T + b1, 0.0)
    return jax.nn.sigmoid(h @ w2.T + b2)


if __name__ == "__main__":
    key = jax.random.PRNGKey(0)
    kx, kp, kx2, kx3 = jax.random.split(key, 4)

    neurons = 32
    params = init_params(kp, neurons)

    # 1) Tiny batch consistent with the module (30 input features).
    x = jax.random.normal(kx, (8, IN_FEATURES), dtype=jnp.float32)
    out = jax.block_until_ready(classificador_forward(x, params))
    ref = reference_forward(x, params)
    assert out.shape == (8, 1)
    assert jnp.allclose(out, ref, atol=1e-4, rtol=1e-4), "f32 mismatch vs reference"

    # 2) Ragged multi-tile batch-major path (padding + lane-dense output blocks).
    x2 = jax.random.normal(kx2, (300, IN_FEATURES), dtype=jnp.float32)
    out2 = jax.block_until_ready(classificador_forward(x2, params, tile_b=128))
    ref2 = reference_forward(x2, params)
    assert out2.shape == (300, 1)
    assert jnp.allclose(out2, ref2, atol=1e-4, rtol=1e-4), "ragged-batch mismatch"

    # 3) Feature-major (lane-dense x) path: producer supplies x as (30, B).
    #    (Transposed here only to build test data; real producers should emit
    #    this layout directly -- a hot-path transpose would erase the win.)
    x2_fm = jnp.asarray(x2.T)
    out3 = jax.block_until_ready(
        classificador_forward(x2_fm, params, tile_b=128, features_major=True))
    assert out3.shape == (300, 1)
    assert jnp.allclose(out3, ref2, atol=1e-4, rtol=1e-4), "feature-major mismatch"

    # 4) bf16 x storage + bf16 MXU compute (f32 accumulation / bias / sigmoid).
    x2_bf16_fm = x2_fm.astype(jnp.bfloat16)
    out4 = jax.block_until_ready(
        classificador_forward(x2_bf16_fm, params, tile_b=128,
                              compute_dtype=jnp.bfloat16, features_major=True))
    ref2_bf16 = reference_forward(x2_bf16_fm.T.astype(jnp.float32), params)
    assert jnp.allclose(out4, ref2_bf16, atol=2e-2), "bf16 path mismatch"

    # 5) Larger batch exercising generation-sized tiles, >=2-tile megacore split
    #    and the VMEM budget / vmem_limit_bytes plumbing.
    x5 = jax.random.normal(kx3, (4096, IN_FEATURES), dtype=jnp.float32)
    out5 = jax.block_until_ready(classificador_forward(x5, params))
    ref5 = reference_forward(x5, params)
    assert out5.shape == (4096, 1)
    assert jnp.allclose(out5, ref5, atol=1e-4, rtol=1e-4), "large-batch mismatch"

    print("KERNEL_OK")
</pallas_src>

<mosaic_0001>
module attributes {stable_mosaic.version = 11 : i64} {
  func.func @_k(%arg0: i32, %arg1: memref<8x128xf32, #tpu.memory_space<vmem>>, %arg2: memref<8x128xf32, #tpu.memory_space<vmem>>, %arg3: memref<8x128xf32, #tpu.memory_space<vmem>>) attributes {dimension_semantics = [#tpu.dimension_semantics<arbitrary>], iteration_bounds = array<i64: 4>, scalar_prefetch = 0 : i64, scratch_operands = 0 : i64, tpu.core_type = #tpu.core_type<tc>, window_params = [{pipeline_mode = #tpu.pipeline_mode<synchronous>, transform_indices = @transform_0, window_bounds = array<i64: 8, 128>}, {transform_indices = @transform_1, window_bounds = array<i64: 8, 128>}, {transform_indices = @transform_2, window_bounds = array<i64: 8, 128>}]} {
    %c0 = arith.constant 0 : index
    %c0_0 = arith.constant 0 : index
    %0 = vector.load %arg1[%c0, %c0_0] : memref<8x128xf32, #tpu.memory_space<vmem>>, vector<8x128xf32>
    %c0_1 = arith.constant 0 : index
    %c0_2 = arith.constant 0 : index
    %1 = vector.load %arg2[%c0_1, %c0_2] : memref<8x128xf32, #tpu.memory_space<vmem>>, vector<8x128xf32>
    %2 = arith.addf %0, %1 : vector<8x128xf32>
    %c0_3 = arith.constant 0 : index
    %c0_4 = arith.constant 0 : index
    %3 = vector.load %arg3[%c0_3, %c0_4] : memref<8x128xf32, #tpu.memory_space<vmem>>, vector<8x128xf32>
    tpu.vector_store %arg3[%c0_3, %c0_4], %2 {strides = array<i32>} : memref<8x128xf32, #tpu.memory_space<vmem>>, vector<8x128xf32>,
    return
  }
  func.func @transform_0(%arg0: i32) -> (i32, i32) {
    %c0_i32 = arith.constant 0 : i32
    %c0_i32_0 = arith.constant 0 : i32
    %c0_i32_1 = arith.constant 0 : i32
    return %c0_i32, %c0_i32_0 : i32, i32
  }
  func.func @transform_1(%arg0: i32) -> (i32, i32) {
    %c0_i32 = arith.constant 0 : i32
    %c0_i32_0 = arith.constant 0 : i32
    return %arg0, %c0_i32 : i32, i32
  }
  func.func @transform_2(%arg0: i32) -> (i32, i32) {
    %c0_i32 = arith.constant 0 : i32
    %c0_i32_0 = arith.constant 0 : i32
    return %arg0, %c0_i32 : i32, i32
  }
}

module attributes {stable_mosaic.version = 11 : i64} {
  func.func @mlp_kernel(%arg0: i32, %arg1: memref<128x30xf32, #tpu.memory_space<vmem>>, %arg2: memref<32x30xf32, #tpu.memory_space<vmem>>, %arg3: memref<32x1xf32, #tpu.memory_space<vmem>>, %arg4: memref<32x32xf32, #tpu.memory_space<vmem>>, %arg5: memref<32x1xf32, #tpu.memory_space<vmem>>, %arg6: memref<32x1xf32, #tpu.memory_space<vmem>>, %arg7: memref<1x1xf32, #tpu.memory_space<vmem>>, %arg8: memref<1x128xf32, #tpu.memory_space<vmem>>) attributes {dimension_semantics = [#tpu.dimension_semantics<parallel>], iteration_bounds = array<i64: 1>, scalar_prefetch = 0 : i64, scratch_operands = 0 : i64, tpu.core_type = #tpu.core_type<tc>, window_params = [{transform_indices = @transform_0, window_bounds = array<i64: 128, 30>}, {pipeline_mode = #tpu.pipeline_mode<synchronous>, transform_indices = @transform_1, window_bounds = array<i64: 32, 30>}, {pipeline_mode = #tpu.pipeline_mode<synchronous>, transform_indices = @transform_2, window_bounds = array<i64: 32, 1>}, {pipeline_mode = #tpu.pipeline_mode<synchronous>, transform_indices = @transform_3, window_bounds = array<i64: 32, 32>}, {pipeline_mode = #tpu.pipeline_mode<synchronous>, transform_indices = @transform_4, window_bounds = array<i64: 32, 1>}, {pipeline_mode = #tpu.pipeline_mode<synchronous>, transform_indices = @transform_5, window_bounds = array<i64: 32, 1>}, {pipeline_mode = #tpu.pipeline_mode<synchronous>, transform_indices = @transform_6, window_bounds = array<i64: 1, 1>}, {transform_indices = @transform_7, window_bounds = array<i64: 1, 128>}]} {
    %c0 = arith.constant 0 : index
    %c0_0 = arith.constant 0 : index
    %0 = vector.load %arg1[%c0, %c0_0] : memref<128x30xf32, #tpu.memory_space<vmem>>, vector<128x30xf32>
    %c0_1 = arith.constant 0 : index
    %c0_2 = arith.constant 0 : index
    %1 = vector.load %arg2[%c0_1, %c0_2] : memref<32x30xf32, #tpu.memory_space<vmem>>, vector<32x30xf32>
    %cst = arith.constant dense<0.000000e+00> : vector<32x128xf32>
    %2 = tpu.matmul %1, %0, %cst {dimension_numbers = #tpu.dot_dimension_numbers<[1], [1], [0], [0], [0, 0, 1, 0], [], []>} : vector<32x30xf32>, vector<128x30xf32>, vector<32x128xf32> -> vector<32x128xf32>
    %c0_3 = arith.constant 0 : index
    %c0_4 = arith.constant 0 : index
    %3 = vector.load %arg3[%c0_3, %c0_4] : memref<32x1xf32, #tpu.memory_space<vmem>>, vector<32x1xf32>
    %4 = vector.broadcast %3 : vector<32x1xf32> to vector<32x128xf32>
    %5 = arith.addf %2, %4 : vector<32x128xf32>
    %cst_5 = arith.constant 0.000000e+00 : f32
    %6 = vector.broadcast %cst_5 : f32 to vector<32x128xf32>
    %7 = arith.maximumf %5, %6 : vector<32x128xf32>
    %c0_6 = arith.constant 0 : index
    %c0_7 = arith.constant 0 : index
    %8 = vector.load %arg4[%c0_6, %c0_7] : memref<32x32xf32, #tpu.memory_space<vmem>>, vector<32x32xf32>
    %cst_8 = arith.constant dense<0.000000e+00> : vector<32x128xf32>
    %9 = tpu.matmul %8, %7, %cst_8 {dimension_numbers = #tpu.dot_dimension_numbers<[1], [0], [0], [1], [0, 0, 1, 1], [], []>} : vector<32x32xf32>, vector<32x128xf32>, vector<32x128xf32> -> vector<32x128xf32>
    %c0_9 = arith.constant 0 : index
    %c0_10 = arith.constant 0 : index
    %10 = vector.load %arg5[%c0_9, %c0_10] : memref<32x1xf32, #tpu.memory_space<vmem>>, vector<32x1xf32>
    %11 = vector.broadcast %10 : vector<32x1xf32> to vector<32x128xf32>
    %12 = arith.addf %9, %11 : vector<32x128xf32>
    %cst_11 = arith.constant 0.000000e+00 : f32
    %13 = vector.broadcast %cst_11 : f32 to vector<32x128xf32>
    %14 = arith.maximumf %12, %13 : vector<32x128xf32>
    %c0_12 = arith.constant 0 : index
    %c0_13 = arith.constant 0 : index
    %15 = vector.load %arg6[%c0_12, %c0_13] : memref<32x1xf32, #tpu.memory_space<vmem>>, vector<32x1xf32>
    %16 = vector.broadcast %15 : vector<32x1xf32> to vector<32x128xf32>
    %17 = arith.mulf %14, %16 : vector<32x128xf32>
    %cst_14 = arith.constant dense<0.000000e+00> : vector<128xf32>
    %18 = vector.multi_reduction <add>, %17, %cst_14 [0] : vector<32x128xf32> to vector<128xf32>
    %19 = vector.shape_cast %18 : vector<128xf32> to vector<1x128xf32>
    %c0_15 = arith.constant 0 : index
    %c0_16 = arith.constant 0 : index
    %20 = vector.load %arg7[%c0_15, %c0_16] : memref<1x1xf32, #tpu.memory_space<vmem>>, vector<1x1xf32>
    %21 = vector.broadcast %20 : vector<1x1xf32> to vector<1x128xf32>
    %22 = arith.addf %19, %21 : vector<1x128xf32>
    %23 = arith.negf %22 : vector<1x128xf32>
    %24 = math.exp %23 : vector<1x128xf32>
    %cst_17 = arith.constant 1.000000e+00 : f32
    %25 = vector.broadcast %cst_17 : f32 to vector<1x128xf32>
    %26 = arith.addf %25, %24 : vector<1x128xf32>
    %27 = arith.divf %25, %26 : vector<1x128xf32>
    %c0_18 = arith.constant 0 : index
    %c0_19 = arith.constant 0 : index
    %28 = vector.load %arg8[%c0_18, %c0_19] : memref<1x128xf32, #tpu.memory_space<vmem>>, vector<1x128xf32>
    tpu.vector_store %arg8[%c0_18, %c0_19], %27 {strides = array<i32>} : memref<1x128xf32, #tpu.memory_space<vmem>>, vector<1x128xf32>,
    return
  }
  func.func @transform_0(%arg0: i32) -> (i32, i32) {
    %c0_i32 = arith.constant 0 : i32
    %c0_i32_0 = arith.constant 0 : i32
    return %arg0, %c0_i32 : i32, i32
  }
  func.func @transform_1(%arg0: i32) -> (i32, i32) {
    %c0_i32 = arith.constant 0 : i32
    %c0_i32_0 = arith.constant 0 : i32
    %c0_i32_1 = arith.constant 0 : i32
    return %c0_i32, %c0_i32_0 : i32, i32
  }
  func.func @transform_2(%arg0: i32) -> (i32, i32) {
    %c0_i32 = arith.constant 0 : i32
    %c0_i32_0 = arith.constant 0 : i32
    %c0_i32_1 = arith.constant 0 : i32
    return %c0_i32, %c0_i32_0 : i32, i32
  }
  func.func @transform_3(%arg0: i32) -> (i32, i32) {
    %c0_i32 = arith.constant 0 : i32
    %c0_i32_0 = arith.constant 0 : i32
    %c0_i32_1 = arith.constant 0 : i32
    return %c0_i32, %c0_i32_0 : i32, i32
  }
  func.func @transform_4(%arg0: i32) -> (i32, i32) {
    %c0_i32 = arith.constant 0 : i32
    %c0_i32_0 = arith.constant 0 : i32
    %c0_i32_1 = arith.constant 0 : i32
    return %c0_i32, %c0_i32_0 : i32, i32
  }
  func.func @transform_5(%arg0: i32) -> (i32, i32) {
    %c0_i32 = arith.constant 0 : i32
    %c0_i32_0 = arith.constant 0 : i32
    %c0_i32_1 = arith.constant 0 : i32
    return %c0_i32, %c0_i32_0 : i32, i32
  }
  func.func @transform_6(%arg0: i32) -> (i32, i32) {
    %c0_i32 = arith.constant 0 : i32
    %c0_i32_0 = arith.constant 0 : i32
    %c0_i32_1 = arith.constant 0 : i32
    return %c0_i32, %c0_i32_0 : i32, i32
  }
  func.func @transform_7(%arg0: i32) -> (i32, i32) {
    %c0_i32 = arith.constant 0 : i32
    %c0_i32_0 = arith.constant 0 : i32
    return %c0_i32, %arg0 : i32, i32
  }
}

</mosaic_0001>

<llo_original>
// kernel: tpu_custom_call.1
$region0: #{tpu_custom_call.1}
  #allocation0 [shape = 'u32[]', space=smem, size = 0x4, offset = 0x4, fixed_abs, tag = 'smem constant byte address 0x4 - core index']
  #allocation1 [shape = 'u32[144,128]{1,0:T(1,128)}', space=vmem, size = 0x12000, scoped, tag = 'internal scratch']
  %s0 = inlined_call_operand.hbm [shape: f32[8,128], index: 0, kind: input, shape index: {}]
  %s1 = inlined_call_operand.hbm [shape: f32[32,128], index: 1, kind: input, shape index: {}]
  %s2 = inlined_call_operand.hbm [shape: f32[32,128], index: 2, kind: output, shape index: {}]
  %s3 = sld [smem:[#allocation0]]
  $region49: #{tpu_custom_call.1} parent=0
    _
  %s5 = ssub.s32 1, %s3
  %s6 = scalar_select 0, %s5, %s3
  $region1: #{tpu_custom_call.1} parent=0
    #allocation2 [shape = 'u8[4096]{0}', space=vmem, size = 0x1000, scoped, tag = 'input window, operand 0, single buffered']
    #allocation3 [shape = 's32[2]{0}', space=sflag, size = 0x8, scoped, tag = 'scoped memory for tpu_custom_call.1']
    #allocation4 [shape = 's32[2]{0}', space=sflag, size = 0x8, scoped, tag = 'scoped memory for tpu_custom_call.1']
    #allocation5 [shape = 'u8[8192]{0}', space=vmem, size = 0x2000, scoped, tag = 'input window, operand 1']
    #allocation6 [shape = 's32[2]{0}', space=sflag, size = 0x8, scoped, tag = 'scoped memory for tpu_custom_call.1']
    #allocation7 [shape = 'u8[8192]{0}', space=vmem, size = 0x2000, scoped, tag = 'output window, operand 0']
    %7 = vsyncpa [#allocation3], 0
    %8 = vsyncpa [#allocation6], 0
    %s9 = scalar_lea.sflag [#allocation6], 1
    %10 = vsyncpa %s9, 0
    %11 = vsyncpa [#allocation4], 0
    %s12 = scalar_lea.sflag [#allocation4], 1
    %13 = vsyncpa %s12, 0
    loop: start=0, step=1, limit=6
    $region2: #{tpu_custom_call.1} parent=1 // loop_pre_header
      _
    $region3: #{tpu_custom_call.1} parent=1 // loop_header
      %s15 = sphi 0, %s19
      %p16 = scmp.ge.s32.totalorder %s15, 6
      %s23 = sphi 0, %s23
      %s25 = sphi 0, %s23
      %s26 = sphi 0, %s25
      %s40 = sphi 0, %s26
      %s46 = sphi 0, %s48
      %s49 = sphi 0, %s46
      %s50 = sphi 0, %s49
      %s66 = sphi 0, %s50
      %s72 = sphi 0, %s74
      %s75 = sphi 0, %s72
      %s76 = sphi 0, %s75
      %s92 = sphi 0, %s76
    $region4: #{tpu_custom_call.1} parent=1 // loop_header_branch
      %18 = sbr.rel (%p16) target = $region8
    $region5: #{tpu_custom_call.1} parent=1 // loop_body
      %s20 = ssub.s32 %s15, 1
      %s21 = ssub.s32 %s15, 2
      %s22 = sadd.s32 %s15, 1
      %s24 = sadd.s32 %s23, 1
      %p27 = scmp.eq.s32.totalorder %s15, 3
      %p28 = scmp.ne.s32.totalorder %s23, %s25
      %p29 = scmp.eq.s32.totalorder %s15, 0
      %p30 = por %p28, %p29
      %p31 = scmp.ne.s32.totalorder %s23, %s25
      %p32 = scmp.eq.s32.totalorder %s20, 3
      %p33 = por %p31, %p32
      %p34 = scmp.ne.s32.totalorder %s25, %s26
      %p35 = scmp.eq.s32.totalorder %s20, 0
      %p36 = por %p34, %p35
      %p37 = scmp.ne.s32.totalorder %s25, %s26
      %p38 = scmp.eq.s32.totalorder %s21, 3
      %p39 = por %p37, %p38
      %p41 = scmp.ne.s32.totalorder %s26, %s40
      %p42 = scmp.eq.s32.totalorder %s21, 0
      %p43 = por %p41, %p42
      %s44 = ssub.s32 %s15, %s22
      %p45 = scmp.eq.s32.totalorder %s44, 0
      %s47 = sadd.s32 %s46, 1
      %s48 = scalar_select %p45, %s46, %s47
      %p51 = pneg %p45
      %p52 = scmp.eq.s32.totalorder %s15, 3
      %p53 = por %p51, %p52
      %p54 = scmp.ne.s32.totalorder %s46, %s49
      %p55 = scmp.eq.s32.totalorder %s15, 0
      %p56 = por %p54, %p55
      %p57 = scmp.ne.s32.totalorder %s46, %s49
      %p58 = scmp.eq.s32.totalorder %s20, 3
      %p59 = por %p57, %p58
      %p60 = scmp.ne.s32.totalorder %s49, %s50
      %p61 = scmp.eq.s32.totalorder %s20, 0
      %p62 = por %p60, %p61
      %p63 = scmp.ne.s32.totalorder %s49, %s50
      %p64 = scmp.eq.s32.totalorder %s21, 3
      %p65 = por %p63, %p64
      %p67 = scmp.ne.s32.totalorder %s50, %s66
      %p68 = scmp.eq.s32.totalorder %s21, 0
      %p69 = por %p67, %p68
      %s70 = ssub.s32 %s15, %s22
      %p71 = scmp.eq.s32.totalorder %s70, 0
      %s73 = sadd.s32 %s72, 1
      %s74 = scalar_select %p71, %s72, %s73
      %p77 = pneg %p71
      %p78 = scmp.eq.s32.totalorder %s15, 3
      %p79 = por %p77, %p78
      %p80 = scmp.ne.s32.totalorder %s72, %s75
      %p81 = scmp.eq.s32.totalorder %s15, 0
      %p82 = por %p80, %p81
      %p83 = scmp.ne.s32.totalorder %s72, %s75
      %p84 = scmp.eq.s32.totalorder %s20, 3
      %p85 = por %p83, %p84
      %p86 = scmp.ne.s32.totalorder %s75, %s76
      %p87 = scmp.eq.s32.totalorder %s20, 0
      %p88 = por %p86, %p87
      %p89 = scmp.ne.s32.totalorder %s75, %s76
      %p90 = scmp.eq.s32.totalorder %s21, 3
      %p91 = por %p89, %p90
      %p93 = scmp.ne.s32.totalorder %s76, %s92
      %p94 = scmp.eq.s32.totalorder %s21, 0
      %p95 = por %p93, %p94
      %p96 = scmp.le.s32.totalorder 1, %s15
      %p97 = scmp.lt.s32.totalorder %s15, 5
      %p98 = pnand %p96, %p97
      %p99 = pneg %p98
      // Predicated region
      $region9: #{tpu_custom_call.1} parent=5 // pred_check
        _
      $region10: #{tpu_custom_call.1} parent=5 // pred_check_branch
        %101 = sbr.rel (%p98) target = $region12
      $region11: #{tpu_custom_call.1} parent=5 // pred_region
        %s102 = ssub.s32 %s15, 1
        // Predicated region
        $region13: #{tpu_custom_call.1} parent=11 // pred_check
          %p103 = pneg %p36
        $region14: #{tpu_custom_call.1} parent=11 // pred_check_branch
          %105 = sbr.rel (%p103) target = $region16
        $region15: #{tpu_custom_call.1} parent=11 // pred_region
          %s107 = ssub.s32 128, 128
          %108 = vsyncadd [#allocation3], %s107
          %s110 = sshll.u32 [#allocation2], 4
          %s111 = int_to_ptr.vmem [resolvable:$true] %s110
          %113 = dma.hbm_to_vmem [thread:$0]  %s0, 128, %s111, [#allocation3]
        $region16: #{tpu_custom_call.1} parent=11 // pred_fallthru
          _
      $region12: #{tpu_custom_call.1} parent=5 // pred_fallthru
        _
      %p114 = scmp.lt.s32.totalorder %s15, 4
      // Predicated region
      $region17: #{tpu_custom_call.1} parent=5 // pred_check
        %p115 = pneg %p114
      $region18: #{tpu_custom_call.1} parent=5 // pred_check_branch
        %117 = sbr.rel (%p115) target = $region20
      $region19: #{tpu_custom_call.1} parent=5 // pred_region
        // Predicated region
        $region21: #{tpu_custom_call.1} parent=19 // pred_check
          %p118 = pneg %p56
        $region22: #{tpu_custom_call.1} parent=19 // pred_check_branch
          %120 = sbr.rel (%p118) target = $region24
        $region23: #{tpu_custom_call.1} parent=19 // pred_region
          %s121 = sand.u32 %s46, 1
          %s122 = scalar_lea.sflag [#allocation6], %s121
          %s123 = sand.u32 %s46, 1
          %s124 = smul.addr %s123, 8
          %s125 = scalar_lea.vmem [#allocation5], %s124
          %s127 = ssub.s32 128, 128
          %128 = vsyncadd %s122, %s127
          %s129 = smul.addr %s15, 128
          %s130 = scalar_lea.hbm %s1, %s129
          %s132 = sshll.u32 %s125, 4
          %s133 = int_to_ptr.vmem [resolvable:$true] %s132
          %135 = dma.hbm_to_vmem [thread:$0]  %s130, 128, %s133, %s122
        $region24: #{tpu_custom_call.1} parent=19 // pred_fallthru
          _
      $region20: #{tpu_custom_call.1} parent=5 // pred_fallthru
        _
      %p136 = scmp.le.s32.totalorder 1, %s15
      %p137 = scmp.lt.s32.totalorder %s15, 5
      %p138 = pnand %p136, %p137
      %p139 = pneg %p138
      // Predicated region
      $region25: #{tpu_custom_call.1} parent=5 // pred_check
        _
      $region26: #{tpu_custom_call.1} parent=5 // pred_check_branch
        %141 = sbr.rel (%p138) target = $region28
      $region27: #{tpu_custom_call.1} parent=5 // pred_region
        %s142 = ssub.s32 %s15, 1
        // Predicated region
        $region29: #{tpu_custom_call.1} parent=27 // pred_check
          %p143 = pneg %p36
        $region30: #{tpu_custom_call.1} parent=27 // pred_check_branch
          %145 = sbr.rel (%p143) target = $region32
        $region31: #{tpu_custom_call.1} parent=27 // pred_region
          %146 = dma.done [#allocation3], 128
        $region32: #{tpu_custom_call.1} parent=27 // pred_fallthru
          _
        %s147 = sand.u32 %s49, 1
        %s148 = scalar_lea.sflag [#allocation6], %s147
        %s149 = sand.u32 %s49, 1
        %s150 = smul.addr %s149, 8
        %s151 = scalar_lea.vmem [#allocation5], %s150
        // Predicated region
        $region33: #{tpu_custom_call.1} parent=27 // pred_check
          %p152 = pneg %p62
        $region34: #{tpu_custom_call.1} parent=27 // pred_check_branch
          %154 = sbr.rel (%p152) target = $region36
        $region35: #{tpu_custom_call.1} parent=27 // pred_region
          %155 = dma.done %s148, 128
        $region36: #{tpu_custom_call.1} parent=27 // pred_fallthru
          _
        %p156 = pneg %p36
        %p157 = pneg %p33
        %s158 = sand.u32 %s49, 1
        %s159 = scalar_lea.sflag [#allocation6], %s158
        %s160 = sand.u32 %s49, 1
        %s161 = smul.addr %s160, 8
        %s162 = scalar_lea.vmem [#allocation5], %s161
        %p163 = pneg %p62
        %p164 = pneg %p59
        %p165 = pneg %p88
        %p166 = pneg %p85
        %s167 = sand.u32 %s75, 1
        %s168 = scalar_lea.sflag [#allocation4], %s167
        %s169 = sand.u32 %s75, 1
        %s170 = smul.addr %s169, 8
        %s171 = scalar_lea.vmem [#allocation7], %s170
        %v172 = vld [vmem:[#allocation2] sm:$0xff]
        %v173 = vld [vmem:[%s151] sm:$0xff]
        %v174 = vadd.f32 %v172, %v173
        %175 = vst [vmem:[%s171] sm:$0xff] %v174
        %s176 = sand.u32 %s75, 1
        %s177 = scalar_lea.sflag [#allocation4], %s176
        %s178 = sand.u32 %s75, 1
        %s179 = smul.addr %s178, 8
        %s180 = scalar_lea.vmem [#allocation7], %s179
        // Predicated region
        $region37: #{tpu_custom_call.1} parent=27 // pred_check
          %p181 = pneg %p85
        $region38: #{tpu_custom_call.1} parent=27 // pred_check_branch
          %183 = sbr.rel (%p181) target = $region40
        $region39: #{tpu_custom_call.1} parent=27 // pred_region
          %s185 = ssub.s32 128, 128
          %186 = vsyncadd %s177, %s185
          %s187 = smul.addr %s20, 128
          %s188 = scalar_lea.hbm %s2, %s187
          %s190 = sshll.u32 %s180, 4
          %s191 = int_to_ptr.vmem [resolvable:$true] %s190
          %193 = dma.vmem_to_hbm [thread:$0]  %s191, 128, %s188, %s177
        $region40: #{tpu_custom_call.1} parent=27 // pred_fallthru
          _
      $region28: #{tpu_custom_call.1} parent=5 // pred_fallthru
        _
      %p194 = scmp.le.s32.totalorder 2, %s15
      // Predicated region
      $region41: #{tpu_custom_call.1} parent=5 // pred_check
        %p195 = pneg %p194
      $region42: #{tpu_custom_call.1} parent=5 // pred_check_branch
        %197 = sbr.rel (%p195) target = $region44
      $region43: #{tpu_custom_call.1} parent=5 // pred_region
        %s198 = ssub.s32 %s15, 2
        // Predicated region
        $region45: #{tpu_custom_call.1} parent=43 // pred_check
          %p199 = pneg %p91
        $region46: #{tpu_custom_call.1} parent=43 // pred_check_branch
          %201 = sbr.rel (%p199) target = $region48
        $region47: #{tpu_custom_call.1} parent=43 // pred_region
          %s202 = sand.u32 %s76, 1
          %s203 = scalar_lea.sflag [#allocation4], %s202
          %s204 = sand.u32 %s76, 1
          %s205 = smul.addr %s204, 8
          %s206 = scalar_lea.vmem [#allocation7], %s205
          %207 = dma.done %s203, 128
        $region48: #{tpu_custom_call.1} parent=43 // pred_fallthru
          _
      $region44: #{tpu_custom_call.1} parent=5 // pred_fallthru
        _
    $region6: #{tpu_custom_call.1} parent=1 // loop_footer
      %s19 = sadd.s32 1, %s15
    $region7: #{tpu_custom_call.1} parent=1 // loop_footer_branch
      %14 = sbr.rel target = $region3
    $region8: #{tpu_custom_call.1} parent=1 // loop_exit
      _
    %208 = vsyncpa [#allocation3], 1
    %s209 = scalar_lea.sflag [#allocation3], 1
    %210 = vsyncpa %s209, 1
    %211 = vsyncpa [#allocation6], 1
    %s212 = scalar_lea.sflag [#allocation6], 1
    %213 = vsyncpa %s212, 1
    %214 = vsyncpa [#allocation4], 1
    %s215 = scalar_lea.sflag [#allocation4], 1
    %216 = vsyncpa %s215, 1

// kernel: tpu_custom_call.1
$region0: #{tpu_custom_call.1}
  #allocation0 [shape = 'u32[]', space=smem, size = 0x4, offset = 0x4, fixed_abs, tag = 'smem constant byte address 0x4 - core index']
  #allocation1 [shape = 'u32[144,128]{1,0:T(1,128)}', space=vmem, size = 0x12000, scoped, tag = 'internal scratch']
  #allocation2 [shape = 'f32[1,1]{1,0:T(1,128)S(1)}', space=vmem, size = 0x200, scoped, tag = 'scoped memory for tpu_custom_call.1']
  %s0 = inlined_call_operand.vmem [shape: f32[128,30], index: 0, kind: input, shape index: {}]
  %s1 = inlined_call_operand.vmem [shape: f32[32,30], index: 1, kind: input, shape index: {}]
  %s2 = inlined_call_operand.vmem [shape: f32[32,1], index: 2, kind: input, shape index: {}]
  %s3 = inlined_call_operand.vmem [shape: f32[32,32], index: 3, kind: input, shape index: {}]
  %s4 = inlined_call_operand.vmem [shape: f32[32,1], index: 4, kind: input, shape index: {}]
  %s5 = inlined_call_operand.vmem [shape: f32[32,1], index: 5, kind: input, shape index: {}]
  %s6 = inlined_call_operand.<no memory space> [shape: f32[1,1], index: 6, kind: input, shape index: {}]
  %s7 = inlined_call_operand.hbm [shape: f32[1,128], index: 7, kind: output, shape index: {}]
  %s8 = sld [smem:[#allocation0]]
  $region38: #{tpu_custom_call.1} parent=0
    _
  %s10 = ssub.s32 1, %s8
  %s11 = scalar_select 0, %s10, %s8
  %v12 = vstv %s6
  %13 = vst [vmem:[#allocation2] sm:$0x1] %v12
  $region1: #{tpu_custom_call.1} parent=0
    #allocation3 [shape = 'u8[512]{0}', space=vmem, size = 0x400, scoped, tag = 'output window, operand 0, single buffered']
    #allocation4 [shape = 's32[1]{0}', space=sflag, size = 0x4, scoped, tag = 'scoped memory for tpu_custom_call.1']
    %14 = vsyncpa [#allocation4], 0
    // Predicated region
    $region2: #{tpu_custom_call.1} parent=1 // pred_check
      _
    $region3: #{tpu_custom_call.1} parent=1 // pred_check_branch
      %16 = sbr.rel (0) target = $region5
    $region4: #{tpu_custom_call.1} parent=1 // pred_region
      _
    $region5: #{tpu_custom_call.1} parent=1 // pred_fallthru
      _
    // Predicated region
    $region6: #{tpu_custom_call.1} parent=1 // pred_check
      _
    $region7: #{tpu_custom_call.1} parent=1 // pred_check_branch
      %18 = sbr.rel (0) target = $region9
    $region8: #{tpu_custom_call.1} parent=1 // pred_region
      _
    $region9: #{tpu_custom_call.1} parent=1 // pred_fallthru
      _
    // Predicated region
    $region10: #{tpu_custom_call.1} parent=1 // pred_check
      _
    $region11: #{tpu_custom_call.1} parent=1 // pred_check_branch
      %20 = sbr.rel (0) target = $region13
    $region12: #{tpu_custom_call.1} parent=1 // pred_region
      _
    $region13: #{tpu_custom_call.1} parent=1 // pred_fallthru
      _
    // Predicated region
    $region14: #{tpu_custom_call.1} parent=1 // pred_check
      _
    $region15: #{tpu_custom_call.1} parent=1 // pred_check_branch
      %22 = sbr.rel (0) target = $region17
    $region16: #{tpu_custom_call.1} parent=1 // pred_region
      _
    $region17: #{tpu_custom_call.1} parent=1 // pred_fallthru
      _
    // Predicated region
    $region18: #{tpu_custom_call.1} parent=1 // pred_check
      _
    $region19: #{tpu_custom_call.1} parent=1 // pred_check_branch
      %24 = sbr.rel (0) target = $region21
    $region20: #{tpu_custom_call.1} parent=1 // pred_region
      _
    $region21: #{tpu_custom_call.1} parent=1 // pred_fallthru
      _
    // Predicated region
    $region22: #{tpu_custom_call.1} parent=1 // pred_check
      _
    $region23: #{tpu_custom_call.1} parent=1 // pred_check_branch
      %26 = sbr.rel (0) target = $region25
    $region24: #{tpu_custom_call.1} parent=1 // pred_region
      _
    $region25: #{tpu_custom_call.1} parent=1 // pred_fallthru
      _
    // Predicated region
    $region26: #{tpu_custom_call.1} parent=1 // pred_check
      _
    $region27: #{tpu_custom_call.1} parent=1 // pred_check_branch
      %28 = sbr.rel (0) target = $region29
    $region28: #{tpu_custom_call.1} parent=1 // pred_region
      _
    $region29: #{tpu_custom_call.1} parent=1 // pred_fallthru
      _
    %v29 = vld [vmem:[%s0] sm:$0xff]
    %v30 = vld [vmem:[%s0 + $0x8] sm:$0xff]
    %v31 = vld [vmem:[%s0 + $0x10] sm:$0xff]
    %v32 = vld [vmem:[%s0 + $0x18] sm:$0xff]
    %v33 = vld [vmem:[%s0 + $0x20] sm:$0xff]
    %v34 = vld [vmem:[%s0 + $0x28] sm:$0xff]
    %v35 = vld [vmem:[%s0 + $0x30] sm:$0xff]
    %v36 = vld [vmem:[%s0 + $0x38] sm:$0xff]
    %v37 = vld [vmem:[%s0 + $0x40] sm:$0xff]
    %v38 = vld [vmem:[%s0 + $0x48] sm:$0xff]
    %v39 = vld [vmem:[%s0 + $0x50] sm:$0xff]
    %v40 = vld [vmem:[%s0 + $0x58] sm:$0xff]
    %v41 = vld [vmem:[%s0 + $0x60] sm:$0xff]
    %v42 = vld [vmem:[%s0 + $0x68] sm:$0xff]
    %v43 = vld [vmem:[%s0 + $0x70] sm:$0xff]
    %v44 = vld [vmem:[%s0 + $0x78] sm:$0xff]
    %v45 = vld [vmem:[%s1] sm:$0xff]
    %v46 = vld [vmem:[%s1 + $0x8] sm:$0xff]
    %v47 = vld [vmem:[%s1 + $0x10] sm:$0xff]
    %v48 = vld [vmem:[%s1 + $0x18] sm:$0xff]
    %v49 = vld [vmem:[%s2] sm:$0xff]
    %v50 = vld [vmem:[%s2 + $0x8] sm:$0xff]
    %v51 = vld [vmem:[%s2 + $0x10] sm:$0xff]
    %v52 = vld [vmem:[%s2 + $0x18] sm:$0xff]
    %54 = vset.pattern.permute.xlu0 0
    %55 = vperm.xlu0 %54, %v49
    %v56 = vpop.permute.xlu0 %55
    %59 = vset.pattern.permute.xlu0 0
    %60 = vperm.xlu0 %59, %v50
    %v61 = vpop.permute.xlu0 %60
    %64 = vset.pattern.permute.xlu0 0
    %65 = vperm.xlu0 %64, %v51
    %v66 = vpop.permute.xlu0 %65
    %69 = vset.pattern.permute.xlu0 0
    %70 = vperm.xlu0 %69, %v52
    %v71 = vpop.permute.xlu0 %70
    %vm73 = vcmask 244736
    %v75 = vsel %vm73, %v45, 0
    %v78 = vsel %vm73, %v46, 0
    %v81 = vsel %vm73, %v47, 0
    %v84 = vsel %vm73, %v48, 0
    %v87 = vsel %vm73, %v29, 0
    %v90 = vsel %vm73, %v30, 0
    %v93 = vsel %vm73, %v31, 0
    %v96 = vsel %vm73, %v32, 0
    %v99 = vsel %vm73, %v33, 0
    %v102 = vsel %vm73, %v34, 0
    %v105 = vsel %vm73, %v35, 0
    %v108 = vsel %vm73, %v36, 0
    %v111 = vsel %vm73, %v37, 0
    %v114 = vsel %vm73, %v38, 0
    %v117 = vsel %vm73, %v39, 0
    %v120 = vsel %vm73, %v40, 0
    %v123 = vsel %vm73, %v41, 0
    %v126 = vsel %vm73, %v42, 0
    %v129 = vsel %vm73, %v43, 0
    %v132 = vsel %vm73, %v44, 0
    %134 = vmatprep.subr.mxu0 0.0
    %135 = vmatpush1.xpose.msra.mxu0 %v132
    %136 = vmatprep.subr.mxu0 0.0
    %137 = vmatpush1.xpose.msra.mxu0 %v129
    %138 = vmatprep.subr.mxu0 0.0
    %139 = vmatpush1.xpose.msra.mxu0 %v126
    %140 = vmatprep.subr.mxu0 0.0
    %141 = vmatpush1.xpose.msra.mxu0 %v123
    %142 = vmatprep.subr.mxu0 0.0
    %143 = vmatpush1.xpose.msra.mxu0 %v120
    %144 = vmatprep.subr.mxu0 0.0
    %145 = vmatpush1.xpose.msra.mxu0 %v117
    %146 = vmatprep.subr.mxu0 0.0
    %147 = vmatpush1.xpose.msra.mxu0 %v114
    %148 = vmatprep.subr.mxu0 0.0
    %149 = vmatpush1.xpose.msra.mxu0 %v111
    %150 = vmatprep.subr.mxu0 0.0
    %151 = vmatpush1.xpose.msra.mxu0 %v108
    %152 = vmatprep.subr.mxu0 0.0
    %153 = vmatpush1.xpose.msra.mxu0 %v105
    %154 = vmatprep.subr.mxu0 0.0
    %155 = vmatpush1.xpose.msra.mxu0 %v102
    %156 = vmatprep.subr.mxu0 0.0
    %157 = vmatpush1.xpose.msra.mxu0 %v99
    %158 = vmatprep.subr.mxu0 0.0
    %159 = vmatpush1.xpose.msra.mxu0 %v96
    %160 = vmatprep.subr.mxu0 0.0
    %161 = vmatpush1.xpose.msra.mxu0 %v93
    %162 = vmatprep.subr.mxu0 0.0
    %163 = vmatpush1.xpose.msra.mxu0 %v90
    %164 = vmatprep.subr.mxu0 0.0
    %165 = vmatpush1.xpose.msra.mxu0 %v87
    %166 = vmatprep.subr.mxu0 0.0
    %167 = vmatpush2.xpose.msra.mxu0 0.0
    %168 = vmatprep.subr.mxu0 0.0
    %169 = vmatpush2.xpose.msra.mxu0 0.0
    %170 = vmatprep.subr.mxu0 0.0
    %171 = vmatpush2.xpose.msra.mxu0 0.0
    %172 = vmatprep.subr.mxu0 0.0
    %173 = vmatpush2.xpose.msra.mxu0 0.0
    %174 = vmatprep.subr.mxu0 0.0
    %175 = vmatpush2.xpose.msra.mxu0 0.0
    %176 = vmatprep.subr.mxu0 0.0
    %177 = vmatpush2.xpose.msra.mxu0 0.0
    %178 = vmatprep.subr.mxu0 0.0
    %179 = vmatpush2.xpose.msra.mxu0 0.0
    %180 = vmatprep.subr.mxu0 0.0
    %181 = vmatpush2.xpose.msra.mxu0 0.0
    %182 = vmatprep.subr.mxu0 0.0
    %183 = vmatpush2.xpose.msra.mxu0 0.0
    %184 = vmatprep.subr.mxu0 0.0
    %185 = vmatpush2.xpose.msra.mxu0 0.0
    %186 = vmatprep.subr.mxu0 0.0
    %187 = vmatpush2.xpose.msra.mxu0 0.0
    %188 = vmatprep.subr.mxu0 0.0
    %189 = vmatpush2.xpose.msra.mxu0 0.0
    %190 = vmatprep.subr.mxu0 0.0
    %191 = vmatpush2.xpose.msra.mxu0 0.0
    %192 = vmatprep.subr.mxu0 0.0
    %193 = vmatpush2.xpose.msra.mxu0 0.0
    %194 = vmatprep.subr.mxu0 0.0
    %195 = vmatpush2.xpose.msra.mxu0 0.0
    %196 = vmatprep.subr.mxu0 0.0
    %197 = vmatpush2.xpose.msra.mxu0 0.0
    %198 = vmatprep.mubr.f32.mxu0 0.0
    %199 = vmatmul.mubr.f32.gmra.mxu0 %v75
    %v200 = vpop.f32.mrf.mxu0
    %v201 = vadd.f32 %v56, %v200
    %v202 = vpop.f32.mrf.mxu0
    %203 = vmatprep.mubr.f32.mxu0 0.0
    %204 = vmatmul.mubr.f32.gmra.mxu0 %v78
    %v205 = vpop.f32.mrf.mxu0
    %v206 = vadd.f32 %v61, %v205
    %v207 = vpop.f32.mrf.mxu0
    %208 = vmatprep.mubr.f32.mxu0 0.0
    %209 = vmatmul.mubr.f32.gmra.mxu0 %v81
    %v210 = vpop.f32.mrf.mxu0
    %v211 = vadd.f32 %v66, %v210
    %v212 = vpop.f32.mrf.mxu0
    %213 = vmatprep.mubr.f32.mxu0 0.0
    %214 = vmatmul.mubr.f32.gmra.mxu0 %v84
    %v215 = vpop.f32.mrf.mxu0
    %v216 = vadd.f32 %v71, %v215
    %v217 = vpop.f32.mrf.mxu0
    %218 = vdwg.mxu0
    %v219 = vmax.f32 %v201, 0.0
    %v220 = vmax.f32 %v206, 0.0
    %v221 = vmax.f32 %v211, 0.0
    %v222 = vmax.f32 %v216, 0.0
    %v223 = vld [vmem:[%s3] sm:$0xff]
    %v224 = vld [vmem:[%s3 + $0x8] sm:$0xff]
    %v225 = vld [vmem:[%s3 + $0x10] sm:$0xff]
    %v226 = vld [vmem:[%s3 + $0x18] sm:$0xff]
    %v227 = vld [vmem:[%s4] sm:$0xff]
    %v228 = vld [vmem:[%s4 + $0x8] sm:$0xff]
    %v229 = vld [vmem:[%s4 + $0x10] sm:$0xff]
    %v230 = vld [vmem:[%s4 + $0x18] sm:$0xff]
    %232 = vset.pattern.permute.xlu0 0
    %233 = vperm.xlu0 %232, %v227
    %v234 = vpop.permute.xlu0 %233
    %237 = vset.pattern.permute.xlu0 0
    %238 = vperm.xlu0 %237, %v228
    %v239 = vpop.permute.xlu0 %238
    %242 = vset.pattern.permute.xlu0 0
    %243 = vperm.xlu0 %242, %v229
    %v244 = vpop.permute.xlu0 %243
    %247 = vset.pattern.permute.xlu0 0
    %248 = vperm.xlu0 %247, %v230
    %v249 = vpop.permute.xlu0 %248
    %vm251 = vcmask 261120
    %v253 = vsel %vm251, %v223, 0
    %v256 = vsel %vm251, %v224, 0
    %v259 = vsel %vm251, %v225, 0
    %v262 = vsel %vm251, %v226, 0
    %264 = vmatprep.subr.mxu0 0.0
    %265 = vmatpush1.msra.mxu0 0.0
    %266 = vmatprep.subr.mxu0 0.0
    %267 = vmatpush1.msra.mxu0 0.0
    %268 = vmatprep.subr.mxu0 0.0
    %269 = vmatpush1.msra.mxu0 0.0
    %270 = vmatprep.subr.mxu0 0.0
    %271 = vmatpush1.msra.mxu0 0.0
    %272 = vmatprep.subr.mxu0 0.0
    %273 = vmatpush1.msra.mxu0 0.0
    %274 = vmatprep.subr.mxu0 0.0
    %275 = vmatpush1.msra.mxu0 0.0
    %276 = vmatprep.subr.mxu0 0.0
    %277 = vmatpush1.msra.mxu0 0.0
    %278 = vmatprep.subr.mxu0 0.0
    %279 = vmatpush1.msra.mxu0 0.0
    %280 = vmatprep.subr.mxu0 0.0
    %281 = vmatpush1.msra.mxu0 0.0
    %282 = vmatprep.subr.mxu0 0.0
    %283 = vmatpush1.msra.mxu0 0.0
    %284 = vmatprep.subr.mxu0 0.0
    %285 = vmatpush1.msra.mxu0 0.0
    %286 = vmatprep.subr.mxu0 0.0
    %287 = vmatpush1.msra.mxu0 0.0
    %288 = vmatprep.subr.mxu0 0.0
    %289 = vmatpush1.msra.mxu0 %v222
    %290 = vmatprep.subr.mxu0 0.0
    %291 = vmatpush1.msra.mxu0 %v221
    %292 = vmatprep.subr.mxu0 0.0
    %293 = vmatpush1.msra.mxu0 %v220
    %294 = vmatprep.subr.mxu0 0.0
    %295 = vmatpush1.msra.mxu0 %v219
    %296 = vmatprep.subr.mxu0 0.0
    %297 = vmatpush2.msra.mxu0 0.0
    %298 = vmatprep.subr.mxu0 0.0
    %299 = vmatpush2.msra.mxu0 0.0
    %300 = vmatprep.subr.mxu0 0.0
    %301 = vmatpush2.msra.mxu0 0.0
    %302 = vmatprep.subr.mxu0 0.0
    %303 = vmatpush2.msra.mxu0 0.0
    %304 = vmatprep.subr.mxu0 0.0
    %305 = vmatpush2.msra.mxu0 0.0
    %306 = vmatprep.subr.mxu0 0.0
    %307 = vmatpush2.msra.mxu0 0.0
    %308 = vmatprep.subr.mxu0 0.0
    %309 = vmatpush2.msra.mxu0 0.0
    %310 = vmatprep.subr.mxu0 0.0
    %311 = vmatpush2.msra.mxu0 0.0
    %312 = vmatprep.subr.mxu0 0.0
    %313 = vmatpush2.msra.mxu0 0.0
    %314 = vmatprep.subr.mxu0 0.0
    %315 = vmatpush2.msra.mxu0 0.0
    %316 = vmatprep.subr.mxu0 0.0
    %317 = vmatpush2.msra.mxu0 0.0
    %318 = vmatprep.subr.mxu0 0.0
    %319 = vmatpush2.msra.mxu0 0.0
    %320 = vmatprep.subr.mxu0 0.0
    %321 = vmatpush2.msra.mxu0 0.0
    %322 = vmatprep.subr.mxu0 0.0
    %323 = vmatpush2.msra.mxu0 0.0
    %324 = vmatprep.subr.mxu0 0.0
    %325 = vmatpush2.msra.mxu0 0.0
    %326 = vmatprep.subr.mxu0 0.0
    %327 = vmatpush2.msra.mxu0 0.0
    %328 = vmatprep.mubr.f32.mxu0 0.0
    %329 = vmatmul.mubr.f32.gmra.mxu0 %v253
    %v330 = vpop.f32.mrf.mxu0
    %v331 = vadd.f32 %v234, %v330
    %v332 = vpop.f32.mrf.mxu0
    %333 = vmatprep.mubr.f32.mxu0 0.0
    %334 = vmatmul.mubr.f32.gmra.mxu0 %v256
    %v335 = vpop.f32.mrf.mxu0
    %v336 = vadd.f32 %v239, %v335
    %v337 = vpop.f32.mrf.mxu0
    %338 = vmatprep.mubr.f32.mxu0 0.0
    %339 = vmatmul.mubr.f32.gmra.mxu0 %v259
    %v340 = vpop.f32.mrf.mxu0
    %v341 = vadd.f32 %v244, %v340
    %v342 = vpop.f32.mrf.mxu0
    %343 = vmatprep.mubr.f32.mxu0 0.0
    %344 = vmatmul.mubr.f32.gmra.mxu0 %v262
    %v345 = vpop.f32.mrf.mxu0
    %v346 = vadd.f32 %v249, %v345
    %v347 = vpop.f32.mrf.mxu0
    %348 = vdwg.mxu0
    %v349 = vmax.f32 %v331, 0.0
    %v350 = vmax.f32 %v336, 0.0
    %v351 = vmax.f32 %v341, 0.0
    %v352 = vmax.f32 %v346, 0.0
    %v353 = vld [vmem:[%s5] sm:$0xff]
    %v354 = vld [vmem:[%s5 + $0x8] sm:$0xff]
    %v355 = vld [vmem:[%s5 + $0x10] sm:$0xff]
    %v356 = vld [vmem:[%s5 + $0x18] sm:$0xff]
    %358 = vset.pattern.permute.xlu0 0
    %359 = vperm.xlu0 %358, %v353
    %v360 = vpop.permute.xlu0 %359
    %363 = vset.pattern.permute.xlu0 0
    %364 = vperm.xlu0 %363, %v354
    %v365 = vpop.permute.xlu0 %364
    %368 = vset.pattern.permute.xlu0 0
    %369 = vperm.xlu0 %368, %v355
    %v370 = vpop.permute.xlu0 %369
    %373 = vset.pattern.permute.xlu0 0
    %374 = vperm.xlu0 %373, %v356
    %v375 = vpop.permute.xlu0 %374
    %v377 = vmul.f32 %v349, %v360
    %v378 = vmul.f32 %v350, %v365
    %v379 = vmul.f32 %v351, %v370
    %v380 = vmul.f32 %v352, %v375
    %v381 = vadd.f32 %v377, %v378
    %v382 = vadd.f32 %v381, %v379
    %v383 = vadd.f32 %v382, %v380
    %v384 = vrot.slane %v383, 4
    %v385 = vadd.f32 %v383, %v384
    %v386 = vrot.slane %v385, 2
    %v387 = vadd.f32 %v385, %v386
    %v388 = vrot.slane %v387, 1
    %v389 = vadd.f32 %v387, %v388
    %v390 = vld [vmem:[#allocation2] sm:$0x1]
    %392 = vset.pattern.permute.xlu0 0
    %393 = vperm.xlu0 %392, %v390
    %v394 = vpop.permute.xlu0 %393
    %v396 = vlaneseq
    %v397 = vshrl.u32 %v396, 7
    %v398 = vsub.s32 0, %v397
    %v399 = vrot.slane %v394, %v398
    %v400 = vadd.f32 %v389, %v399
    %v401 = vxor.u32 %v400, 2147483648
    %v402 = vmul.f32 %v401, 1.442695
    %v403 = vpow.pop %v402
    %v404 = vadd.f32 %v403, 1.0
    %v405 = vrcp.pop %v404
    %v406 = vmul.f32 1.0, %v405
    %407 = vst [vmem:[#allocation3] sm:$0x1] %v406
    // Predicated region
    $region30: #{tpu_custom_call.1} parent=1 // pred_check
      _
    $region31: #{tpu_custom_call.1} parent=1 // pred_check_branch
      %409 = sbr.rel (0) target = $region33
    $region32: #{tpu_custom_call.1} parent=1 // pred_region
      %s411 = ssub.s32 16, 16
      %412 = vsyncadd [#allocation4], %s411
      %s414 = sshll.u32 [#allocation3], 4
      %s415 = int_to_ptr.vmem [resolvable:$true] %s414
      %417 = dma.vmem_to_hbm [thread:$0]  %s415, 16, %s7, [#allocation4]
    $region33: #{tpu_custom_call.1} parent=1 // pred_fallthru
      _
    // Predicated region
    $region34: #{tpu_custom_call.1} parent=1 // pred_check
      _
    $region35: #{tpu_custom_call.1} parent=1 // pred_check_branch
      %419 = sbr.rel (0) target = $region37
    $region36: #{tpu_custom_call.1} parent=1 // pred_region
      %420 = dma.done [#allocation4], 16
    $region37: #{tpu_custom_call.1} parent=1 // pred_fallthru
      _
    %421 = vsyncpa [#allocation4], 1

</llo_original>
